<compile_context>
chip_gen: v6e
topology: v6e:2x2x1
jax: 0.10.0
libtpu: 0.0.40
codegen_flags: <defaults>
</compile_context>

<pallas_src>
import functools

import jax
import jax.numpy as jnp
from jax import lax
from jax.experimental import pallas as pl
from jax.experimental.pallas import tpu as pltpu


def _rdb_kernel(x_ref, w1_ref, b1_ref, w2_ref, b2_ref, o_ref, *, L):
    # x_ref: (C, T) f32 with T = Bn*L (Bn whole samples laid out along lanes)
    # w*_ref: (C, 3C) bf16, taps stacked k-major [W_k0 | W_k1 | W_k2]
    # b*_ref: (C, 1) f32
    x = x_ref[...]
    _, T = x.shape

    lane = lax.broadcasted_iota(jnp.int32, (1, T), 1)
    pos = lane % L                       # position within each sample
    first = pos == 0                     # columns with no left neighbor
    last = pos == (L - 1)                # columns with no right neighbor

    def conv1d_k3(h, w_ref, b_ref):
        # h[l-1] / h[l+1] via lane rotation; zero the per-sample boundary columns
        # (reproduces PyTorch's zero padding, even across sample boundaries).
        h_prev = jnp.where(first, 0.0, pltpu.roll(h, 1, axis=1))
        h_next = jnp.where(last, 0.0, pltpu.roll(h, T - 1, axis=1))
        rhs = jnp.concatenate(
            [h_prev.astype(jnp.bfloat16),
             h.astype(jnp.bfloat16),
             h_next.astype(jnp.bfloat16)],
            axis=0)                      # (3C, T), one MXU push per conv
        out = jnp.dot(w_ref[...], rhs, preferred_element_type=jnp.float32)
        return out + b_ref[...]          # (C, 1) bias broadcasts over lanes (f32)

    h = conv1d_k3(x, w1_ref, b1_ref)     # conv1
    h = conv1d_k3(h, w2_ref, b2_ref)     # conv2
    h = jnp.where(h >= 0.0, h, 0.2 * h)  # LeakyReLU(0.2), f32
    o_ref[...] = (x + h).astype(o_ref.dtype)   # dense residual


def _pick_samples_per_step(N, L, target_lanes=1024):
    """Largest/most-balanced Bn with N % Bn == 0 and (Bn*L) % 128 == 0."""
    cands = [bn for bn in range(1, N + 1)
             if N % bn == 0 and (bn * L) % 128 == 0]
    if not cands:
        raise ValueError(
            f"No valid lane tile: need Bn dividing N={N} with (Bn*L) % 128 == 0 "
            f"(L={L}). Pad L to a multiple of 128 on the host.")
    return min(cands, key=lambda bn: abs(bn * L - target_lanes))


def residual_dense_block(x, w1, b1, w2, b2):
    """x: (N, C, L) f32; w1/w2: (C, C, 3) PyTorch Conv1d layout; b1/b2: (C,)."""
    N, C, L = x.shape
    Bn = _pick_samples_per_step(N, L)    # samples per grid step
    T = Bn * L                           # lane tile
    NT = N * L

    # relayout: channels -> sublanes, batch*seq -> lanes (lane-dense in/out tiles)
    x2d = jnp.transpose(x, (1, 0, 2)).reshape(C, NT)

    # stack the 3 taps along the contraction axis (k-major): (C_out, 3*C_in), bf16
    w1s = jnp.transpose(w1, (0, 2, 1)).reshape(C, 3 * C).astype(jnp.bfloat16)
    w2s = jnp.transpose(w2, (0, 2, 1)).reshape(C, 3 * C).astype(jnp.bfloat16)
    b1k = b1.reshape(C, 1).astype(jnp.float32)
    b2k = b2.reshape(C, 1).astype(jnp.float32)

    flops = 2 * 2 * C * (3 * C) * NT     # two fused-tap matmuls
    bytes_accessed = 2 * NT * C * 4 + 2 * (w1s.size * 2 + C * 4)

    out2d = pl.pallas_call(
        functools.partial(_rdb_kernel, L=L),
        out_shape=jax.ShapeDtypeStruct((C, NT), x.dtype),
        grid_spec=pltpu.PrefetchScalarGridSpec(
            num_scalar_prefetch=0,
            grid=(NT // T,),
            in_specs=[
                pl.BlockSpec((C, T), lambda g: (0, g)),
                pl.BlockSpec((C, 3 * C), lambda g: (0, 0)),
                pl.BlockSpec((C, 1), lambda g: (0, 0)),
                pl.BlockSpec((C, 3 * C), lambda g: (0, 0)),
                pl.BlockSpec((C, 1), lambda g: (0, 0)),
            ],
            out_specs=pl.BlockSpec((C, T), lambda g: (0, g)),
        ),
        compiler_params=pltpu.CompilerParams(
            dimension_semantics=("parallel",)),
        cost_estimate=pl.CostEstimate(
            flops=flops, transcendentals=0, bytes_accessed=bytes_accessed),
    )(x2d, w1s, b1k, w2s, b2k)

    return out2d.reshape(C, N, L).transpose(1, 0, 2)


def _reference(x, w1, b1, w2, b2):
    # Pure-JAX f32 reference using lax conv (NCL layout, 1 spatial dim).
    dn = lax.conv_dimension_numbers(x.shape, w1.shape, ("NCH", "OIH", "NCH"))
    h = lax.conv_general_dilated(x, w1, (1,), [(1, 1)], dimension_numbers=dn)
    h = h + b1[None, :, None]
    h = lax.conv_general_dilated(h, w2, (1,), [(1, 1)], dimension_numbers=dn)
    h = h + b2[None, :, None]
    h = jnp.where(h >= 0.0, h, 0.2 * h)
    return x + h


if __name__ == "__main__":
    # small shapes consistent with the module: nf channels, 1D sequence
    N, C, L = 2, 64, 128
    key = jax.random.PRNGKey(0)
    kx, k1, k2, k3, k4 = jax.random.split(key, 5)

    x = jax.random.normal(kx, (N, C, L), dtype=jnp.float32)

    # kaiming_normal_(fan_in, a=0) => std = sqrt(2 / (C_in * k)), then *0.1 scale
    fan_in = C * 3
    std = (2.0 / fan_in) ** 0.5
    w1 = jax.random.normal(k1, (C, C, 3), dtype=jnp.float32) * std * 0.1
    w2 = jax.random.normal(k2, (C, C, 3), dtype=jnp.float32) * std * 0.1
    # small nonzero biases to exercise the bias-add path (module zeroes them at init)
    b1 = jax.random.normal(k3, (C,), dtype=jnp.float32) * 0.01
    b2 = jax.random.normal(k4, (C,), dtype=jnp.float32) * 0.01

    out = residual_dense_block(x, w1, b1, w2, b2)
    out = jax.block_until_ready(out)

    ref = _reference(x, w1, b1, w2, b2)
    assert out.shape == (N, C, L)
    # bf16 MXU operands with f32 accumulation: tolerance relaxed from 1e-5
    assert jnp.allclose(out, ref, atol=1e-2, rtol=1e-2), "mismatch vs reference"

    print("KERNEL_OK")
</pallas_src>

<mosaic_0001>
module attributes {stable_mosaic.version = 11 : i64} {
  func.func @_rdb_kernel(%arg0: i32, %arg1: memref<64x256xf32, #tpu.memory_space<vmem>>, %arg2: memref<64x192xbf16, #tpu.memory_space<vmem>>, %arg3: memref<64x1xf32, #tpu.memory_space<vmem>>, %arg4: memref<64x192xbf16, #tpu.memory_space<vmem>>, %arg5: memref<64x1xf32, #tpu.memory_space<vmem>>, %arg6: memref<64x256xf32, #tpu.memory_space<vmem>>) attributes {dimension_semantics = [#tpu.dimension_semantics<parallel>], iteration_bounds = array<i64: 1>, scalar_prefetch = 0 : i64, scratch_operands = 0 : i64, tpu.core_type = #tpu.core_type<tc>, window_params = [{transform_indices = @transform_0, window_bounds = array<i64: 64, 256>}, {pipeline_mode = #tpu.pipeline_mode<synchronous>, transform_indices = @transform_1, window_bounds = array<i64: 64, 192>}, {pipeline_mode = #tpu.pipeline_mode<synchronous>, transform_indices = @transform_2, window_bounds = array<i64: 64, 1>}, {pipeline_mode = #tpu.pipeline_mode<synchronous>, transform_indices = @transform_3, window_bounds = array<i64: 64, 192>}, {pipeline_mode = #tpu.pipeline_mode<synchronous>, transform_indices = @transform_4, window_bounds = array<i64: 64, 1>}, {transform_indices = @transform_5, window_bounds = array<i64: 64, 256>}]} {
    %c0 = arith.constant 0 : index
    %c0_0 = arith.constant 0 : index
    %0 = vector.load %arg1[%c0, %c0_0] : memref<64x256xf32, #tpu.memory_space<vmem>>, vector<64x256xf32>
    %1 = tpu.iota {dimensions = array<i32: 1>} : vector<1x256xi32>
    %c128_i32 = arith.constant 128 : i32
    %c0_i32 = arith.constant 0 : i32
    %2 = arith.cmpi eq, %c128_i32, %c0_i32 : i32
    %c1_i32 = arith.constant 1 : i32
    %3 = arith.select %2, %c1_i32, %c128_i32 : i32
    %4 = vector.broadcast %3 : i32 to vector<1x256xi32>
    %5 = arith.remsi %1, %4 : vector<1x256xi32>
    %c0_i32_1 = arith.constant 0 : i32
    %6 = vector.broadcast %c0_i32_1 : i32 to vector<1x256xi32>
    %7 = arith.cmpi ne, %5, %6 : vector<1x256xi32>
    %c0_i32_2 = arith.constant 0 : i32
    %8 = vector.broadcast %c0_i32_2 : i32 to vector<1x256xi32>
    %9 = arith.cmpi slt, %5, %8 : vector<1x256xi32>
    %c0_i32_3 = arith.constant 0 : i32
    %10 = arith.cmpi slt, %3, %c0_i32_3 : i32
    %11 = vector.broadcast %10 : i1 to vector<1x256xi1>
    %12 = vector.broadcast %11 : vector<1x256xi1> to vector<1x256xi1>
    %13 = arith.xori %9, %12 : vector<1x256xi1>
    %14 = arith.andi %13, %7 : vector<1x256xi1>
    %15 = vector.broadcast %3 : i32 to vector<1x256xi32>
    %16 = arith.addi %5, %15 : vector<1x256xi32>
    %17 = arith.select %14, %16, %5 : vector<1x256xi1>, vector<1x256xi32>
    %c0_i32_4 = arith.constant 0 : i32
    %18 = vector.broadcast %c0_i32_4 : i32 to vector<1x256xi32>
    %19 = arith.cmpi eq, %17, %18 : vector<1x256xi32>
    %c127_i32 = arith.constant 127 : i32
    %20 = vector.broadcast %c127_i32 : i32 to vector<1x256xi32>
    %21 = arith.cmpi eq, %17, %20 : vector<1x256xi32>
    %c1_i32_5 = arith.constant 1 : i32
    %22 = tpu.dynamic_rotate %0 by %c1_i32_5 dim 1 : vector<64x256xf32>, i32 -> vector<64x256xf32>
    %cst = arith.constant 0.000000e+00 : f32
    %23 = vector.shape_cast %19 : vector<1x256xi1> to vector<1x256xi1>
    %24 = vector.broadcast %23 : vector<1x256xi1> to vector<64x256xi1>
    %25 = vector.broadcast %cst : f32 to vector<64x256xf32>
    %26 = arith.select %24, %25, %22 : vector<64x256xi1>, vector<64x256xf32>
    %c255_i32 = arith.constant 255 : i32
    %27 = tpu.dynamic_rotate %0 by %c255_i32 dim 1 : vector<64x256xf32>, i32 -> vector<64x256xf32>
    %cst_6 = arith.constant 0.000000e+00 : f32
    %28 = vector.shape_cast %21 : vector<1x256xi1> to vector<1x256xi1>
    %29 = vector.broadcast %28 : vector<1x256xi1> to vector<64x256xi1>
    %30 = vector.broadcast %cst_6 : f32 to vector<64x256xf32>
    %31 = arith.select %29, %30, %27 : vector<64x256xi1>, vector<64x256xf32>
    %32 = arith.truncf %26 : vector<64x256xf32> to vector<64x256xbf16>
    %33 = arith.truncf %0 : vector<64x256xf32> to vector<64x256xbf16>
    %34 = arith.truncf %31 : vector<64x256xf32> to vector<64x256xbf16>
    %35 = tpu.concatenate %32, %33, %34 in 0 : vector<64x256xbf16>, vector<64x256xbf16>, vector<64x256xbf16> -> vector<192x256xbf16>
    %c0_7 = arith.constant 0 : index
    %c0_8 = arith.constant 0 : index
    %36 = vector.load %arg2[%c0_7, %c0_8] : memref<64x192xbf16, #tpu.memory_space<vmem>>, vector<64x192xbf16>
    %cst_9 = arith.constant dense<0.000000e+00> : vector<64x256xf32>
    %37 = tpu.matmul %36, %35, %cst_9 {dimension_numbers = #tpu.dot_dimension_numbers<[1], [0], [0], [1], [0, 0, 1, 1], [], []>} : vector<64x192xbf16>, vector<192x256xbf16>, vector<64x256xf32> -> vector<64x256xf32>
    %c0_10 = arith.constant 0 : index
    %c0_11 = arith.constant 0 : index
    %38 = vector.load %arg3[%c0_10, %c0_11] : memref<64x1xf32, #tpu.memory_space<vmem>>, vector<64x1xf32>
    %39 = vector.broadcast %38 : vector<64x1xf32> to vector<64x256xf32>
    %40 = arith.addf %37, %39 : vector<64x256xf32>
    %c1_i32_12 = arith.constant 1 : i32
    %41 = tpu.dynamic_rotate %40 by %c1_i32_12 dim 1 : vector<64x256xf32>, i32 -> vector<64x256xf32>
    %cst_13 = arith.constant 0.000000e+00 : f32
    %42 = vector.shape_cast %19 : vector<1x256xi1> to vector<1x256xi1>
    %43 = vector.broadcast %42 : vector<1x256xi1> to vector<64x256xi1>
    %44 = vector.broadcast %cst_13 : f32 to vector<64x256xf32>
    %45 = arith.select %43, %44, %41 : vector<64x256xi1>, vector<64x256xf32>
    %c255_i32_14 = arith.constant 255 : i32
    %46 = tpu.dynamic_rotate %40 by %c255_i32_14 dim 1 : vector<64x256xf32>, i32 -> vector<64x256xf32>
    %cst_15 = arith.constant 0.000000e+00 : f32
    %47 = vector.shape_cast %21 : vector<1x256xi1> to vector<1x256xi1>
    %48 = vector.broadcast %47 : vector<1x256xi1> to vector<64x256xi1>
    %49 = vector.broadcast %cst_15 : f32 to vector<64x256xf32>
    %50 = arith.select %48, %49, %46 : vector<64x256xi1>, vector<64x256xf32>
    %51 = arith.truncf %45 : vector<64x256xf32> to vector<64x256xbf16>
    %52 = arith.truncf %40 : vector<64x256xf32> to vector<64x256xbf16>
    %53 = arith.truncf %50 : vector<64x256xf32> to vector<64x256xbf16>
    %54 = tpu.concatenate %51, %52, %53 in 0 : vector<64x256xbf16>, vector<64x256xbf16>, vector<64x256xbf16> -> vector<192x256xbf16>
    %c0_16 = arith.constant 0 : index
    %c0_17 = arith.constant 0 : index
    %55 = vector.load %arg4[%c0_16, %c0_17] : memref<64x192xbf16, #tpu.memory_space<vmem>>, vector<64x192xbf16>
    %cst_18 = arith.constant dense<0.000000e+00> : vector<64x256xf32>
    %56 = tpu.matmul %55, %54, %cst_18 {dimension_numbers = #tpu.dot_dimension_numbers<[1], [0], [0], [1], [0, 0, 1, 1], [], []>} : vector<64x192xbf16>, vector<192x256xbf16>, vector<64x256xf32> -> vector<64x256xf32>
    %c0_19 = arith.constant 0 : index
    %c0_20 = arith.constant 0 : index
    %57 = vector.load %arg5[%c0_19, %c0_20] : memref<64x1xf32, #tpu.memory_space<vmem>>, vector<64x1xf32>
    %58 = vector.broadcast %57 : vector<64x1xf32> to vector<64x256xf32>
    %59 = arith.addf %56, %58 : vector<64x256xf32>
    %cst_21 = arith.constant 0.000000e+00 : f32
    %60 = vector.broadcast %cst_21 : f32 to vector<64x256xf32>
    %61 = arith.cmpf oge, %59, %60 : vector<64x256xf32>
    %cst_22 = arith.constant 2.000000e-01 : f32
    %62 = vector.broadcast %cst_22 : f32 to vector<64x256xf32>
    %63 = arith.mulf %62, %59 : vector<64x256xf32>
    %64 = arith.select %61, %59, %63 : vector<64x256xi1>, vector<64x256xf32>
    %65 = arith.addf %0, %64 : vector<64x256xf32>
    %c0_23 = arith.constant 0 : index
    %c0_24 = arith.constant 0 : index
    %66 = vector.load %arg6[%c0_23, %c0_24] : memref<64x256xf32, #tpu.memory_space<vmem>>, vector<64x256xf32>
    tpu.vector_store %arg6[%c0_23, %c0_24], %65 {strides = array<i32>} : memref<64x256xf32, #tpu.memory_space<vmem>>, vector<64x256xf32>,
    return
  }
  func.func @transform_0(%arg0: i32) -> (i32, i32) {
    %c0_i32 = arith.constant 0 : i32
    %c0_i32_0 = arith.constant 0 : i32
    return %c0_i32, %arg0 : i32, i32
  }
  func.func @transform_1(%arg0: i32) -> (i32, i32) {
    %c0_i32 = arith.constant 0 : i32
    %c0_i32_0 = arith.constant 0 : i32
    %c0_i32_1 = arith.constant 0 : i32
    return %c0_i32, %c0_i32_0 : i32, i32
  }
  func.func @transform_2(%arg0: i32) -> (i32, i32) {
    %c0_i32 = arith.constant 0 : i32
    %c0_i32_0 = arith.constant 0 : i32
    %c0_i32_1 = arith.constant 0 : i32
    return %c0_i32, %c0_i32_0 : i32, i32
  }
  func.func @transform_3(%arg0: i32) -> (i32, i32) {
    %c0_i32 = arith.constant 0 : i32
    %c0_i32_0 = arith.constant 0 : i32
    %c0_i32_1 = arith.constant 0 : i32
    return %c0_i32, %c0_i32_0 : i32, i32
  }
  func.func @transform_4(%arg0: i32) -> (i32, i32) {
    %c0_i32 = arith.constant 0 : i32
    %c0_i32_0 = arith.constant 0 : i32
    %c0_i32_1 = arith.constant 0 : i32
    return %c0_i32, %c0_i32_0 : i32, i32
  }
  func.func @transform_5(%arg0: i32) -> (i32, i32) {
    %c0_i32 = arith.constant 0 : i32
    %c0_i32_0 = arith.constant 0 : i32
    return %c0_i32, %arg0 : i32, i32
  }
}

</mosaic_0001>

<llo_original>
// kernel: tpu_custom_call.1
$region0: #{tpu_custom_call.1}
  #allocation0 [shape = 'u32[]', space=smem, size = 0x4, offset = 0x4, fixed_abs, tag = 'smem constant byte address 0x4 - core index']
  #allocation1 [shape = 'u32[144,128]{1,0:T(1,128)}', space=vmem, size = 0x12000, scoped, tag = 'internal scratch']
  %s0 = inlined_call_operand.vmem [shape: f32[64,256], index: 0, kind: input, shape index: {}]
  %s1 = inlined_call_operand.hbm [shape: bf16[64,192], index: 1, kind: input, shape index: {}]
  %s2 = inlined_call_operand.vmem [shape: f32[64,1], index: 2, kind: input, shape index: {}]
  %s3 = inlined_call_operand.hbm [shape: bf16[64,192], index: 3, kind: input, shape index: {}]
  %s4 = inlined_call_operand.vmem [shape: f32[64,1], index: 4, kind: input, shape index: {}]
  %s5 = inlined_call_operand.hbm [shape: f32[64,256], index: 5, kind: output, shape index: {}]
  %s6 = sld [smem:[#allocation0]]
  $region38: #{tpu_custom_call.1} parent=0
    _
  %s8 = ssub.s32 1, %s6
  %s9 = scalar_select 0, %s8, %s6
  $region1: #{tpu_custom_call.1} parent=0
    #allocation2 [shape = 'u8[32768]{0}', space=vmem, size = 0x8000, scoped, tag = 'input window, operand 1, single buffered']
    #allocation3 [shape = 's32[1]{0}', space=sflag, size = 0x4, scoped, tag = 'scoped memory for tpu_custom_call.1']
    #allocation4 [shape = 's32[1]{0}', space=sflag, size = 0x4, scoped, tag = 'scoped memory for tpu_custom_call.1']
    #allocation5 [shape = 'u8[32768]{0}', space=vmem, size = 0x8000, scoped, tag = 'input window, operand 3, single buffered']
    #allocation6 [shape = 's32[1]{0}', space=sflag, size = 0x4, scoped, tag = 'scoped memory for tpu_custom_call.1']
    #allocation7 [shape = 'u8[65536]{0}', space=vmem, size = 0x10000, scoped, tag = 'output window, operand 0, single buffered']
    %10 = vsyncpa [#allocation3], 0
    %11 = vsyncpa [#allocation6], 0
    %12 = vsyncpa [#allocation4], 0
    // Predicated region
    $region2: #{tpu_custom_call.1} parent=1 // pred_check
      _
    $region3: #{tpu_custom_call.1} parent=1 // pred_check_branch
      %14 = sbr.rel (0) target = $region5
    $region4: #{tpu_custom_call.1} parent=1 // pred_region
      _
    $region5: #{tpu_custom_call.1} parent=1 // pred_fallthru
      _
    // Predicated region
    $region6: #{tpu_custom_call.1} parent=1 // pred_check
      _
    $region7: #{tpu_custom_call.1} parent=1 // pred_check_branch
      %16 = sbr.rel (0) target = $region9
    $region8: #{tpu_custom_call.1} parent=1 // pred_region
      %s18 = ssub.s32 1024, 1024
      %19 = vsyncadd [#allocation3], %s18
      %s20 = sshll.u32 [#allocation2], 4
      %s21 = int_to_ptr.vmem [resolvable:$true] %s20
      %26 = dma.hbm_to_vmem [thread:$0]  %s1, 1024, %s21, [#allocation3], 128, 128, 8
    $region9: #{tpu_custom_call.1} parent=1 // pred_fallthru
      _
    // Predicated region
    $region10: #{tpu_custom_call.1} parent=1 // pred_check
      _
    $region11: #{tpu_custom_call.1} parent=1 // pred_check_branch
      %28 = sbr.rel (0) target = $region13
    $region12: #{tpu_custom_call.1} parent=1 // pred_region
      _
    $region13: #{tpu_custom_call.1} parent=1 // pred_fallthru
      _
    // Predicated region
    $region14: #{tpu_custom_call.1} parent=1 // pred_check
      _
    $region15: #{tpu_custom_call.1} parent=1 // pred_check_branch
      %30 = sbr.rel (0) target = $region17
    $region16: #{tpu_custom_call.1} parent=1 // pred_region
      %s32 = ssub.s32 1024, 1024
      %33 = vsyncadd [#allocation6], %s32
      %s34 = sshll.u32 [#allocation5], 4
      %s35 = int_to_ptr.vmem [resolvable:$true] %s34
      %40 = dma.hbm_to_vmem [thread:$0]  %s3, 1024, %s35, [#allocation6], 128, 128, 8
    $region17: #{tpu_custom_call.1} parent=1 // pred_fallthru
      _
    // Predicated region
    $region18: #{tpu_custom_call.1} parent=1 // pred_check
      _
    $region19: #{tpu_custom_call.1} parent=1 // pred_check_branch
      %42 = sbr.rel (0) target = $region21
    $region20: #{tpu_custom_call.1} parent=1 // pred_region
      _
    $region21: #{tpu_custom_call.1} parent=1 // pred_fallthru
      _
    // Predicated region
    $region22: #{tpu_custom_call.1} parent=1 // pred_check
      _
    $region23: #{tpu_custom_call.1} parent=1 // pred_check_branch
      %44 = sbr.rel (0) target = $region25
    $region24: #{tpu_custom_call.1} parent=1 // pred_region
      %45 = dma.done [#allocation3], 1024
    $region25: #{tpu_custom_call.1} parent=1 // pred_fallthru
      _
    // Predicated region
    $region26: #{tpu_custom_call.1} parent=1 // pred_check
      _
    $region27: #{tpu_custom_call.1} parent=1 // pred_check_branch
      %47 = sbr.rel (0) target = $region29
    $region28: #{tpu_custom_call.1} parent=1 // pred_region
      %48 = dma.done [#allocation6], 1024
    $region29: #{tpu_custom_call.1} parent=1 // pred_fallthru
      _
    %v50 = vld [vmem:[%s0] sm:$0xff]
    %v51 = vld [vmem:[%s0 + $0x8] sm:$0xff]
    %v52 = vld [vmem:[%s0 + $0x10] sm:$0xff]
    %v53 = vld [vmem:[%s0 + $0x18] sm:$0xff]
    %v54 = vld [vmem:[%s0 + $0x20] sm:$0xff]
    %v55 = vld [vmem:[%s0 + $0x28] sm:$0xff]
    %v56 = vld [vmem:[%s0 + $0x30] sm:$0xff]
    %v57 = vld [vmem:[%s0 + $0x38] sm:$0xff]
    %v58 = vld [vmem:[%s0 + $0x40] sm:$0xff]
    %v59 = vld [vmem:[%s0 + $0x48] sm:$0xff]
    %v60 = vld [vmem:[%s0 + $0x50] sm:$0xff]
    %v61 = vld [vmem:[%s0 + $0x58] sm:$0xff]
    %v62 = vld [vmem:[%s0 + $0x60] sm:$0xff]
    %v63 = vld [vmem:[%s0 + $0x68] sm:$0xff]
    %v64 = vld [vmem:[%s0 + $0x70] sm:$0xff]
    %v65 = vld [vmem:[%s0 + $0x78] sm:$0xff]
    %v66 = vlaneseq
    %v67 = vand.u32 %v66, 127
    %v68 = vadd.s32 %v67, 128
    %vm69 = vcmp.lt.s32.totalorder %v67, 0
    %v70 = vsub.s32 0, %v67
    %v71 = vsel %vm69, %v70, %v67
    %v72 = vshrl.u32 %v71, 7
    %v73 = vand.u32 %v71, 127
    %v74 = vsub.s32 0, %v73
    %v75 = vsel %vm69, %v74, %v73
    %vm76 = vcmp.lt.s32.totalorder %v68, 0
    %v77 = vsub.s32 0, %v68
    %v78 = vsel %vm76, %v77, %v68
    %v79 = vshrl.u32 %v78, 7
    %v80 = vand.u32 %v78, 127
    %v81 = vsub.s32 0, %v80
    %v82 = vsel %vm76, %v81, %v80
    %vm83 = vcmp.ne.s32.totalorder %v75, 0
    %vm84 = vcmp.ne.s32.totalorder %v82, 0
    %vm85 = vcmp.lt.s32.totalorder %v75, 0
    %vm86 = vcmp.lt.s32.totalorder %v82, 0
    %vm87 = vmand %vm85, %vm83
    %vm88 = vmand %vm86, %vm84
    %v89 = vadd.s32 %v75, 128
    %v90 = vadd.s32 %v82, 128
    %v91 = vsel %vm87, %v89, %v75
    %v92 = vsel %vm88, %v90, %v82
    %vm93 = vcmp.eq.s32.totalorder %v91, 0
    %vm94 = vcmp.eq.s32.totalorder %v92, 0
    %vm95 = vcmp.eq.s32.totalorder %v91, 127
    %vm96 = vcmp.eq.s32.totalorder %v92, 127
    %97 = vrot.lane.b32.xlu0 %v50, 1
    %v98 = vpop.permute.xlu0 %97
    %99 = vrot.lane.b32.xlu0 %v52, 1
    %v100 = vpop.permute.xlu0 %99
    %101 = vrot.lane.b32.xlu0 %v54, 1
    %v102 = vpop.permute.xlu0 %101
    %103 = vrot.lane.b32.xlu0 %v56, 1
    %v104 = vpop.permute.xlu0 %103
    %105 = vrot.lane.b32.xlu0 %v58, 1
    %v106 = vpop.permute.xlu0 %105
    %107 = vrot.lane.b32.xlu0 %v60, 1
    %v108 = vpop.permute.xlu0 %107
    %109 = vrot.lane.b32.xlu0 %v62, 1
    %v110 = vpop.permute.xlu0 %109
    %111 = vrot.lane.b32.xlu0 %v64, 1
    %v112 = vpop.permute.xlu0 %111
    %113 = vrot.lane.b32.xlu0 %v51, 1
    %v114 = vpop.permute.xlu0 %113
    %115 = vrot.lane.b32.xlu0 %v53, 1
    %v116 = vpop.permute.xlu0 %115
    %117 = vrot.lane.b32.xlu0 %v55, 1
    %v118 = vpop.permute.xlu0 %117
    %119 = vrot.lane.b32.xlu0 %v57, 1
    %v120 = vpop.permute.xlu0 %119
    %121 = vrot.lane.b32.xlu0 %v59, 1
    %v122 = vpop.permute.xlu0 %121
    %123 = vrot.lane.b32.xlu0 %v61, 1
    %v124 = vpop.permute.xlu0 %123
    %125 = vrot.lane.b32.xlu0 %v63, 1
    %v126 = vpop.permute.xlu0 %125
    %127 = vrot.lane.b32.xlu0 %v65, 1
    %v128 = vpop.permute.xlu0 %127
    %vm129 = vcmp.lt.s32.totalorder %v67, 1
    %v130 = vsel %vm129, %v98, %v114
    %v131 = vsel %vm129, %v100, %v116
    %v132 = vsel %vm129, %v102, %v118
    %v133 = vsel %vm129, %v104, %v120
    %v134 = vsel %vm129, %v106, %v122
    %v135 = vsel %vm129, %v108, %v124
    %v136 = vsel %vm129, %v110, %v126
    %v137 = vsel %vm129, %v112, %v128
    %v138 = vsel %vm129, %v114, %v98
    %v139 = vsel %vm129, %v116, %v100
    %v140 = vsel %vm129, %v118, %v102
    %v141 = vsel %vm129, %v120, %v104
    %v142 = vsel %vm129, %v122, %v106
    %v143 = vsel %vm129, %v124, %v108
    %v144 = vsel %vm129, %v126, %v110
    %v145 = vsel %vm129, %v128, %v112
    %v146 = vsel %vm93, 1, 0
    %v147 = vsel %vm94, 1, 0
    %vm148 = vcmp.eq.s32.totalorder %v146, 1
    %vm149 = vcmp.eq.s32.totalorder %v147, 1
    %v150 = vsel %vm148, 0.0, %v138
    %v151 = vsel %vm149, 0.0, %v130
    %v152 = vsel %vm148, 0.0, %v139
    %v153 = vsel %vm149, 0.0, %v131
    %v154 = vsel %vm148, 0.0, %v140
    %v155 = vsel %vm149, 0.0, %v132
    %v156 = vsel %vm148, 0.0, %v141
    %v157 = vsel %vm149, 0.0, %v133
    %v158 = vsel %vm148, 0.0, %v142
    %v159 = vsel %vm149, 0.0, %v134
    %v160 = vsel %vm148, 0.0, %v143
    %v161 = vsel %vm149, 0.0, %v135
    %v162 = vsel %vm148, 0.0, %v144
    %v163 = vsel %vm149, 0.0, %v136
    %v164 = vsel %vm148, 0.0, %v145
    %v165 = vsel %vm149, 0.0, %v137
    %166 = vrot.lane.b32.xlu0 %v50, 127
    %v167 = vpop.permute.xlu0 %166
    %168 = vrot.lane.b32.xlu0 %v52, 127
    %v169 = vpop.permute.xlu0 %168
    %170 = vrot.lane.b32.xlu0 %v54, 127
    %v171 = vpop.permute.xlu0 %170
    %172 = vrot.lane.b32.xlu0 %v56, 127
    %v173 = vpop.permute.xlu0 %172
    %174 = vrot.lane.b32.xlu0 %v58, 127
    %v175 = vpop.permute.xlu0 %174
    %176 = vrot.lane.b32.xlu0 %v60, 127
    %v177 = vpop.permute.xlu0 %176
    %178 = vrot.lane.b32.xlu0 %v62, 127
    %v179 = vpop.permute.xlu0 %178
    %180 = vrot.lane.b32.xlu0 %v64, 127
    %v181 = vpop.permute.xlu0 %180
    %182 = vrot.lane.b32.xlu0 %v51, 127
    %v183 = vpop.permute.xlu0 %182
    %184 = vrot.lane.b32.xlu0 %v53, 127
    %v185 = vpop.permute.xlu0 %184
    %186 = vrot.lane.b32.xlu0 %v55, 127
    %v187 = vpop.permute.xlu0 %186
    %188 = vrot.lane.b32.xlu0 %v57, 127
    %v189 = vpop.permute.xlu0 %188
    %190 = vrot.lane.b32.xlu0 %v59, 127
    %v191 = vpop.permute.xlu0 %190
    %192 = vrot.lane.b32.xlu0 %v61, 127
    %v193 = vpop.permute.xlu0 %192
    %194 = vrot.lane.b32.xlu0 %v63, 127
    %v195 = vpop.permute.xlu0 %194
    %196 = vrot.lane.b32.xlu0 %v65, 127
    %v197 = vpop.permute.xlu0 %196
    %vm198 = vcmp.lt.s32.totalorder %v67, 127
    %v199 = vsel %vm198, %v167, %v183
    %v200 = vsel %vm198, %v169, %v185
    %v201 = vsel %vm198, %v171, %v187
    %v202 = vsel %vm198, %v173, %v189
    %v203 = vsel %vm198, %v175, %v191
    %v204 = vsel %vm198, %v177, %v193
    %v205 = vsel %vm198, %v179, %v195
    %v206 = vsel %vm198, %v181, %v197
    %v207 = vsel %vm198, %v183, %v167
    %v208 = vsel %vm198, %v185, %v169
    %v209 = vsel %vm198, %v187, %v171
    %v210 = vsel %vm198, %v189, %v173
    %v211 = vsel %vm198, %v191, %v175
    %v212 = vsel %vm198, %v193, %v177
    %v213 = vsel %vm198, %v195, %v179
    %v214 = vsel %vm198, %v197, %v181
    %v215 = vsel %vm95, 1, 0
    %v216 = vsel %vm96, 1, 0
    %vm217 = vcmp.eq.s32.totalorder %v215, 1
    %vm218 = vcmp.eq.s32.totalorder %v216, 1
    %v219 = vsel %vm217, 0.0, %v199
    %v220 = vsel %vm218, 0.0, %v207
    %v221 = vsel %vm217, 0.0, %v200
    %v222 = vsel %vm218, 0.0, %v208
    %v223 = vsel %vm217, 0.0, %v201
    %v224 = vsel %vm218, 0.0, %v209
    %v225 = vsel %vm217, 0.0, %v202
    %v226 = vsel %vm218, 0.0, %v210
    %v227 = vsel %vm217, 0.0, %v203
    %v228 = vsel %vm218, 0.0, %v211
    %v229 = vsel %vm217, 0.0, %v204
    %v230 = vsel %vm218, 0.0, %v212
    %v231 = vsel %vm217, 0.0, %v205
    %v232 = vsel %vm218, 0.0, %v213
    %v233 = vsel %vm217, 0.0, %v206
    %v234 = vsel %vm218, 0.0, %v214
    %v235 = vpack.c.bf16 %v152, %v150
    %v236 = vpack.c.bf16 %v153, %v151
    %v237 = vpack.c.bf16 %v156, %v154
    %v238 = vpack.c.bf16 %v157, %v155
    %v239 = vpack.c.bf16 %v160, %v158
    %v240 = vpack.c.bf16 %v161, %v159
    %v241 = vpack.c.bf16 %v164, %v162
    %v242 = vpack.c.bf16 %v165, %v163
    %v243 = vpack.c.bf16 %v52, %v50
    %v244 = vpack.c.bf16 %v53, %v51
    %v245 = vpack.c.bf16 %v56, %v54
    %v246 = vpack.c.bf16 %v57, %v55
    %v247 = vpack.c.bf16 %v60, %v58
    %v248 = vpack.c.bf16 %v61, %v59
    %v249 = vpack.c.bf16 %v64, %v62
    %v250 = vpack.c.bf16 %v65, %v63
    %v251 = vpack.c.bf16 %v221, %v219
    %v252 = vpack.c.bf16 %v222, %v220
    %v253 = vpack.c.bf16 %v225, %v223
    %v254 = vpack.c.bf16 %v226, %v224
    %v255 = vpack.c.bf16 %v229, %v227
    %v256 = vpack.c.bf16 %v230, %v228
    %v257 = vpack.c.bf16 %v233, %v231
    %v258 = vpack.c.bf16 %v234, %v232
    %v259 = vld [vmem:[#allocation2] sm:$0xff]
    %v260 = vld [vmem:[#allocation2 + $0x8] sm:$0xff]
    %v261 = vld [vmem:[#allocation2 + $0x10] sm:$0xff]
    %v262 = vld [vmem:[#allocation2 + $0x18] sm:$0xff]
    %v263 = vld [vmem:[#allocation2 + $0x20] sm:$0xff]
    %v264 = vld [vmem:[#allocation2 + $0x28] sm:$0xff]
    %v265 = vld [vmem:[#allocation2 + $0x30] sm:$0xff]
    %v266 = vld [vmem:[#allocation2 + $0x38] sm:$0xff]
    %v267 = vld [vmem:[%s2] sm:$0xff]
    %v268 = vld [vmem:[%s2 + $0x8] sm:$0xff]
    %v269 = vld [vmem:[%s2 + $0x10] sm:$0xff]
    %v270 = vld [vmem:[%s2 + $0x18] sm:$0xff]
    %v271 = vld [vmem:[%s2 + $0x20] sm:$0xff]
    %v272 = vld [vmem:[%s2 + $0x28] sm:$0xff]
    %v273 = vld [vmem:[%s2 + $0x30] sm:$0xff]
    %v274 = vld [vmem:[%s2 + $0x38] sm:$0xff]
    %276 = vset.pattern.permute.xlu0 0
    %277 = vperm.xlu0 %276, %v267
    %v278 = vpop.permute.xlu0 %277
    %281 = vset.pattern.permute.xlu0 0
    %282 = vperm.xlu0 %281, %v268
    %v283 = vpop.permute.xlu0 %282
    %286 = vset.pattern.permute.xlu0 0
    %287 = vperm.xlu0 %286, %v269
    %v288 = vpop.permute.xlu0 %287
    %291 = vset.pattern.permute.xlu0 0
    %292 = vperm.xlu0 %291, %v270
    %v293 = vpop.permute.xlu0 %292
    %296 = vset.pattern.permute.xlu0 0
    %297 = vperm.xlu0 %296, %v271
    %v298 = vpop.permute.xlu0 %297
    %301 = vset.pattern.permute.xlu0 0
    %302 = vperm.xlu0 %301, %v272
    %v303 = vpop.permute.xlu0 %302
    %306 = vset.pattern.permute.xlu0 0
    %307 = vperm.xlu0 %306, %v273
    %v308 = vpop.permute.xlu0 %307
    %311 = vset.pattern.permute.xlu0 0
    %312 = vperm.xlu0 %311, %v274
    %v313 = vpop.permute.xlu0 %312
    %v323 = vunpack.c.l.b16 %v259
    %v324 = vunpack.c.h.b16 %v259
    %v325 = vunpack.c.l.b16 %v260
    %v326 = vunpack.c.h.b16 %v260
    %v327 = vunpack.c.l.b16 %v261
    %v328 = vunpack.c.h.b16 %v261
    %v329 = vunpack.c.l.b16 %v262
    %v330 = vunpack.c.h.b16 %v262
    %v331 = vunpack.c.l.b16 %v263
    %v332 = vunpack.c.h.b16 %v263
    %v333 = vunpack.c.l.b16 %v264
    %v334 = vunpack.c.h.b16 %v264
    %v335 = vunpack.c.l.b16 %v265
    %v336 = vunpack.c.h.b16 %v265
    %v337 = vunpack.c.l.b16 %v266
    %v338 = vunpack.c.h.b16 %v266
    %v339 = vpack.c.b16 %v325, %v323
    %v340 = vpack.c.b16 %v326, %v324
    %v341 = vpack.c.b16 %v329, %v327
    %v342 = vpack.c.b16 %v330, %v328
    %v343 = vpack.c.b16 %v333, %v331
    %v344 = vpack.c.b16 %v334, %v332
    %v345 = vpack.c.b16 %v337, %v335
    %v346 = vpack.c.b16 %v338, %v336
    %vm351 = vcmask 523264
    %v353 = vsel %vm351, %v340, 0
    %v356 = vsel %vm351, %v342, 0
    %v359 = vsel %vm351, %v344, 0
    %v362 = vsel %vm351, %v346, 0
    %364 = vmatprep.subr.bf16.mxu0 %v250
    %365 = vmatpush1.bf16.msra.mxu0 %v249
    %366 = vmatprep.subr.bf16.mxu0 %v248
    %367 = vmatpush1.bf16.msra.mxu0 %v247
    %368 = vmatprep.subr.bf16.mxu0 %v246
    %369 = vmatpush1.bf16.msra.mxu0 %v245
    %370 = vmatprep.subr.bf16.mxu0 %v244
    %371 = vmatpush1.bf16.msra.mxu0 %v243
    %372 = vmatprep.subr.bf16.mxu0 %v242
    %373 = vmatpush1.bf16.msra.mxu0 %v241
    %374 = vmatprep.subr.bf16.mxu0 %v240
    %375 = vmatpush1.bf16.msra.mxu0 %v239
    %376 = vmatprep.subr.bf16.mxu0 %v238
    %377 = vmatpush1.bf16.msra.mxu0 %v237
    %378 = vmatprep.subr.bf16.mxu0 %v236
    %379 = vmatpush1.bf16.msra.mxu0 %v235
    %380 = vmatprep.subr.bf16.mxu0 0
    %381 = vmatpush2.bf16.msra.mxu0 0
    %382 = vmatprep.subr.bf16.mxu0 0
    %383 = vmatpush2.bf16.msra.mxu0 0
    %384 = vmatprep.subr.bf16.mxu0 0
    %385 = vmatpush2.bf16.msra.mxu0 0
    %386 = vmatprep.subr.bf16.mxu0 0
    %387 = vmatpush2.bf16.msra.mxu0 0
    %388 = vmatprep.subr.bf16.mxu0 %v258
    %389 = vmatpush2.bf16.msra.mxu0 %v257
    %390 = vmatprep.subr.bf16.mxu0 %v256
    %391 = vmatpush2.bf16.msra.mxu0 %v255
    %392 = vmatprep.subr.bf16.mxu0 %v254
    %393 = vmatpush2.bf16.msra.mxu0 %v253
    %394 = vmatprep.subr.bf16.mxu0 %v252
    %395 = vmatpush2.bf16.msra.mxu0 %v251
    %396 = vmatprep.mubr.bf16.mxu0 %v353
    %397 = vmatmul.mubr.bf16.gmra.mxu0 %v339
    %v398 = vpop.f32.mrf.mxu0
    %v399 = vadd.f32 %v278, %v398
    %v400 = vpop.f32.mrf.mxu0
    %v401 = vadd.f32 %v278, %v400
    %v402 = vpop.f32.mrf.mxu0
    %v403 = vadd.f32 %v283, %v402
    %v404 = vpop.f32.mrf.mxu0
    %v405 = vadd.f32 %v283, %v404
    %406 = vmatprep.mubr.bf16.mxu0 %v356
    %407 = vmatmul.mubr.bf16.gmra.mxu0 %v341
    %v408 = vpop.f32.mrf.mxu0
    %v409 = vadd.f32 %v288, %v408
    %v410 = vpop.f32.mrf.mxu0
    %v411 = vadd.f32 %v288, %v410
    %v412 = vpop.f32.mrf.mxu0
    %v413 = vadd.f32 %v293, %v412
    %v414 = vpop.f32.mrf.mxu0
    %v415 = vadd.f32 %v293, %v414
    %416 = vmatprep.mubr.bf16.mxu0 %v359
    %417 = vmatmul.mubr.bf16.gmra.mxu0 %v343
    %v418 = vpop.f32.mrf.mxu0
    %v419 = vadd.f32 %v298, %v418
    %v420 = vpop.f32.mrf.mxu0
    %v421 = vadd.f32 %v298, %v420
    %v422 = vpop.f32.mrf.mxu0
    %v423 = vadd.f32 %v303, %v422
    %v424 = vpop.f32.mrf.mxu0
    %v425 = vadd.f32 %v303, %v424
    %426 = vmatprep.mubr.bf16.mxu0 %v362
    %427 = vmatmul.mubr.bf16.gmra.mxu0 %v345
    %v428 = vpop.f32.mrf.mxu0
    %v429 = vadd.f32 %v308, %v428
    %v430 = vpop.f32.mrf.mxu0
    %v431 = vadd.f32 %v308, %v430
    %v432 = vpop.f32.mrf.mxu0
    %v433 = vadd.f32 %v313, %v432
    %v434 = vpop.f32.mrf.mxu0
    %v435 = vadd.f32 %v313, %v434
    %436 = vdwg.mxu0
    %437 = vrot.lane.b32.xlu0 %v399, 1
    %v438 = vpop.permute.xlu0 %437
    %439 = vrot.lane.b32.xlu0 %v403, 1
    %v440 = vpop.permute.xlu0 %439
    %441 = vrot.lane.b32.xlu0 %v409, 1
    %v442 = vpop.permute.xlu0 %441
    %443 = vrot.lane.b32.xlu0 %v413, 1
    %v444 = vpop.permute.xlu0 %443
    %445 = vrot.lane.b32.xlu0 %v419, 1
    %v446 = vpop.permute.xlu0 %445
    %447 = vrot.lane.b32.xlu0 %v423, 1
    %v448 = vpop.permute.xlu0 %447
    %449 = vrot.lane.b32.xlu0 %v429, 1
    %v450 = vpop.permute.xlu0 %449
    %451 = vrot.lane.b32.xlu0 %v433, 1
    %v452 = vpop.permute.xlu0 %451
    %453 = vrot.lane.b32.xlu0 %v401, 1
    %v454 = vpop.permute.xlu0 %453
    %455 = vrot.lane.b32.xlu0 %v405, 1
    %v456 = vpop.permute.xlu0 %455
    %457 = vrot.lane.b32.xlu0 %v411, 1
    %v458 = vpop.permute.xlu0 %457
    %459 = vrot.lane.b32.xlu0 %v415, 1
    %v460 = vpop.permute.xlu0 %459
    %461 = vrot.lane.b32.xlu0 %v421, 1
    %v462 = vpop.permute.xlu0 %461
    %463 = vrot.lane.b32.xlu0 %v425, 1
    %v464 = vpop.permute.xlu0 %463
    %465 = vrot.lane.b32.xlu0 %v431, 1
    %v466 = vpop.permute.xlu0 %465
    %467 = vrot.lane.b32.xlu0 %v435, 1
    %v468 = vpop.permute.xlu0 %467
    %v469 = vsel %vm129, %v438, %v454
    %v470 = vsel %vm129, %v440, %v456
    %v471 = vsel %vm129, %v442, %v458
    %v472 = vsel %vm129, %v444, %v460
    %v473 = vsel %vm129, %v446, %v462
    %v474 = vsel %vm129, %v448, %v464
    %v475 = vsel %vm129, %v450, %v466
    %v476 = vsel %vm129, %v452, %v468
    %v477 = vsel %vm129, %v454, %v438
    %v478 = vsel %vm129, %v456, %v440
    %v479 = vsel %vm129, %v458, %v442
    %v480 = vsel %vm129, %v460, %v444
    %v481 = vsel %vm129, %v462, %v446
    %v482 = vsel %vm129, %v464, %v448
    %v483 = vsel %vm129, %v466, %v450
    %v484 = vsel %vm129, %v468, %v452
    %v485 = vsel %vm148, 0.0, %v477
    %v486 = vsel %vm149, 0.0, %v469
    %v487 = vsel %vm148, 0.0, %v478
    %v488 = vsel %vm149, 0.0, %v470
    %v489 = vsel %vm148, 0.0, %v479
    %v490 = vsel %vm149, 0.0, %v471
    %v491 = vsel %vm148, 0.0, %v480
    %v492 = vsel %vm149, 0.0, %v472
    %v493 = vsel %vm148, 0.0, %v481
    %v494 = vsel %vm149, 0.0, %v473
    %v495 = vsel %vm148, 0.0, %v482
    %v496 = vsel %vm149, 0.0, %v474
    %v497 = vsel %vm148, 0.0, %v483
    %v498 = vsel %vm149, 0.0, %v475
    %v499 = vsel %vm148, 0.0, %v484
    %v500 = vsel %vm149, 0.0, %v476
    %501 = vrot.lane.b32.xlu0 %v399, 127
    %v502 = vpop.permute.xlu0 %501
    %503 = vrot.lane.b32.xlu0 %v403, 127
    %v504 = vpop.permute.xlu0 %503
    %505 = vrot.lane.b32.xlu0 %v409, 127
    %v506 = vpop.permute.xlu0 %505
    %507 = vrot.lane.b32.xlu0 %v413, 127
    %v508 = vpop.permute.xlu0 %507
    %509 = vrot.lane.b32.xlu0 %v419, 127
    %v510 = vpop.permute.xlu0 %509
    %511 = vrot.lane.b32.xlu0 %v423, 127
    %v512 = vpop.permute.xlu0 %511
    %513 = vrot.lane.b32.xlu0 %v429, 127
    %v514 = vpop.permute.xlu0 %513
    %515 = vrot.lane.b32.xlu0 %v433, 127
    %v516 = vpop.permute.xlu0 %515
    %517 = vrot.lane.b32.xlu0 %v401, 127
    %v518 = vpop.permute.xlu0 %517
    %519 = vrot.lane.b32.xlu0 %v405, 127
    %v520 = vpop.permute.xlu0 %519
    %521 = vrot.lane.b32.xlu0 %v411, 127
    %v522 = vpop.permute.xlu0 %521
    %523 = vrot.lane.b32.xlu0 %v415, 127
    %v524 = vpop.permute.xlu0 %523
    %525 = vrot.lane.b32.xlu0 %v421, 127
    %v526 = vpop.permute.xlu0 %525
    %527 = vrot.lane.b32.xlu0 %v425, 127
    %v528 = vpop.permute.xlu0 %527
    %529 = vrot.lane.b32.xlu0 %v431, 127
    %v530 = vpop.permute.xlu0 %529
    %531 = vrot.lane.b32.xlu0 %v435, 127
    %v532 = vpop.permute.xlu0 %531
    %v533 = vsel %vm198, %v502, %v518
    %v534 = vsel %vm198, %v504, %v520
    %v535 = vsel %vm198, %v506, %v522
    %v536 = vsel %vm198, %v508, %v524
    %v537 = vsel %vm198, %v510, %v526
    %v538 = vsel %vm198, %v512, %v528
    %v539 = vsel %vm198, %v514, %v530
    %v540 = vsel %vm198, %v516, %v532
    %v541 = vsel %vm198, %v518, %v502
    %v542 = vsel %vm198, %v520, %v504
    %v543 = vsel %vm198, %v522, %v506
    %v544 = vsel %vm198, %v524, %v508
    %v545 = vsel %vm198, %v526, %v510
    %v546 = vsel %vm198, %v528, %v512
    %v547 = vsel %vm198, %v530, %v514
    %v548 = vsel %vm198, %v532, %v516
    %v549 = vsel %vm217, 0.0, %v533
    %v550 = vsel %vm218, 0.0, %v541
    %v551 = vsel %vm217, 0.0, %v534
    %v552 = vsel %vm218, 0.0, %v542
    %v553 = vsel %vm217, 0.0, %v535
    %v554 = vsel %vm218, 0.0, %v543
    %v555 = vsel %vm217, 0.0, %v536
    %v556 = vsel %vm218, 0.0, %v544
    %v557 = vsel %vm217, 0.0, %v537
    %v558 = vsel %vm218, 0.0, %v545
    %v559 = vsel %vm217, 0.0, %v538
    %v560 = vsel %vm218, 0.0, %v546
    %v561 = vsel %vm217, 0.0, %v539
    %v562 = vsel %vm218, 0.0, %v547
    %v563 = vsel %vm217, 0.0, %v540
    %v564 = vsel %vm218, 0.0, %v548
    %v565 = vpack.c.bf16 %v487, %v485
    %v566 = vpack.c.bf16 %v488, %v486
    %v567 = vpack.c.bf16 %v491, %v489
    %v568 = vpack.c.bf16 %v492, %v490
    %v569 = vpack.c.bf16 %v495, %v493
    %v570 = vpack.c.bf16 %v496, %v494
    %v571 = vpack.c.bf16 %v499, %v497
    %v572 = vpack.c.bf16 %v500, %v498
    %v573 = vpack.c.bf16 %v403, %v399
    %v574 = vpack.c.bf16 %v405, %v401
    %v575 = vpack.c.bf16 %v413, %v409
    %v576 = vpack.c.bf16 %v415, %v411
    %v577 = vpack.c.bf16 %v423, %v419
    %v578 = vpack.c.bf16 %v425, %v421
    %v579 = vpack.c.bf16 %v433, %v429
    %v580 = vpack.c.bf16 %v435, %v431
    %v581 = vpack.c.bf16 %v551, %v549
    %v582 = vpack.c.bf16 %v552, %v550
    %v583 = vpack.c.bf16 %v555, %v553
    %v584 = vpack.c.bf16 %v556, %v554
    %v585 = vpack.c.bf16 %v559, %v557
    %v586 = vpack.c.bf16 %v560, %v558
    %v587 = vpack.c.bf16 %v563, %v561
    %v588 = vpack.c.bf16 %v564, %v562
    %v589 = vld [vmem:[#allocation5] sm:$0xff]
    %v590 = vld [vmem:[#allocation5 + $0x8] sm:$0xff]
    %v591 = vld [vmem:[#allocation5 + $0x10] sm:$0xff]
    %v592 = vld [vmem:[#allocation5 + $0x18] sm:$0xff]
    %v593 = vld [vmem:[#allocation5 + $0x20] sm:$0xff]
    %v594 = vld [vmem:[#allocation5 + $0x28] sm:$0xff]
    %v595 = vld [vmem:[#allocation5 + $0x30] sm:$0xff]
    %v596 = vld [vmem:[#allocation5 + $0x38] sm:$0xff]
    %v597 = vld [vmem:[%s4] sm:$0xff]
    %v598 = vld [vmem:[%s4 + $0x8] sm:$0xff]
    %v599 = vld [vmem:[%s4 + $0x10] sm:$0xff]
    %v600 = vld [vmem:[%s4 + $0x18] sm:$0xff]
    %v601 = vld [vmem:[%s4 + $0x20] sm:$0xff]
    %v602 = vld [vmem:[%s4 + $0x28] sm:$0xff]
    %v603 = vld [vmem:[%s4 + $0x30] sm:$0xff]
    %v604 = vld [vmem:[%s4 + $0x38] sm:$0xff]
    %606 = vset.pattern.permute.xlu0 0
    %607 = vperm.xlu0 %606, %v597
    %v608 = vpop.permute.xlu0 %607
    %611 = vset.pattern.permute.xlu0 0
    %612 = vperm.xlu0 %611, %v598
    %v613 = vpop.permute.xlu0 %612
    %616 = vset.pattern.permute.xlu0 0
    %617 = vperm.xlu0 %616, %v599
    %v618 = vpop.permute.xlu0 %617
    %621 = vset.pattern.permute.xlu0 0
    %622 = vperm.xlu0 %621, %v600
    %v623 = vpop.permute.xlu0 %622
    %626 = vset.pattern.permute.xlu0 0
    %627 = vperm.xlu0 %626, %v601
    %v628 = vpop.permute.xlu0 %627
    %631 = vset.pattern.permute.xlu0 0
    %632 = vperm.xlu0 %631, %v602
    %v633 = vpop.permute.xlu0 %632
    %636 = vset.pattern.permute.xlu0 0
    %637 = vperm.xlu0 %636, %v603
    %v638 = vpop.permute.xlu0 %637
    %641 = vset.pattern.permute.xlu0 0
    %642 = vperm.xlu0 %641, %v604
    %v643 = vpop.permute.xlu0 %642
    %v653 = vunpack.c.l.b16 %v589
    %v654 = vunpack.c.h.b16 %v589
    %v655 = vunpack.c.l.b16 %v590
    %v656 = vunpack.c.h.b16 %v590
    %v657 = vunpack.c.l.b16 %v591
    %v658 = vunpack.c.h.b16 %v591
    %v659 = vunpack.c.l.b16 %v592
    %v660 = vunpack.c.h.b16 %v592
    %v661 = vunpack.c.l.b16 %v593
    %v662 = vunpack.c.h.b16 %v593
    %v663 = vunpack.c.l.b16 %v594
    %v664 = vunpack.c.h.b16 %v594
    %v665 = vunpack.c.l.b16 %v595
    %v666 = vunpack.c.h.b16 %v595
    %v667 = vunpack.c.l.b16 %v596
    %v668 = vunpack.c.h.b16 %v596
    %v669 = vpack.c.b16 %v655, %v653
    %v670 = vpack.c.b16 %v656, %v654
    %v671 = vpack.c.b16 %v659, %v657
    %v672 = vpack.c.b16 %v660, %v658
    %v673 = vpack.c.b16 %v663, %v661
    %v674 = vpack.c.b16 %v664, %v662
    %v675 = vpack.c.b16 %v667, %v665
    %v676 = vpack.c.b16 %v668, %v666
    %v682 = vsel %vm351, %v670, 0
    %v685 = vsel %vm351, %v672, 0
    %v688 = vsel %vm351, %v674, 0
    %v691 = vsel %vm351, %v676, 0
    %693 = vmatprep.subr.bf16.mxu0 %v580
    %694 = vmatpush1.bf16.msra.mxu0 %v579
    %695 = vmatprep.subr.bf16.mxu0 %v578
    %696 = vmatpush1.bf16.msra.mxu0 %v577
    %697 = vmatprep.subr.bf16.mxu0 %v576
    %698 = vmatpush1.bf16.msra.mxu0 %v575
    %699 = vmatprep.subr.bf16.mxu0 %v574
    %700 = vmatpush1.bf16.msra.mxu0 %v573
    %701 = vmatprep.subr.bf16.mxu0 %v572
    %702 = vmatpush1.bf16.msra.mxu0 %v571
    %703 = vmatprep.subr.bf16.mxu0 %v570
    %704 = vmatpush1.bf16.msra.mxu0 %v569
    %705 = vmatprep.subr.bf16.mxu0 %v568
    %706 = vmatpush1.bf16.msra.mxu0 %v567
    %707 = vmatprep.subr.bf16.mxu0 %v566
    %708 = vmatpush1.bf16.msra.mxu0 %v565
    %709 = vmatprep.subr.bf16.mxu0 0
    %710 = vmatpush2.bf16.msra.mxu0 0
    %711 = vmatprep.subr.bf16.mxu0 0
    %712 = vmatpush2.bf16.msra.mxu0 0
    %713 = vmatprep.subr.bf16.mxu0 0
    %714 = vmatpush2.bf16.msra.mxu0 0
    %715 = vmatprep.subr.bf16.mxu0 0
    %716 = vmatpush2.bf16.msra.mxu0 0
    %717 = vmatprep.subr.bf16.mxu0 %v588
    %718 = vmatpush2.bf16.msra.mxu0 %v587
    %719 = vmatprep.subr.bf16.mxu0 %v586
    %720 = vmatpush2.bf16.msra.mxu0 %v585
    %721 = vmatprep.subr.bf16.mxu0 %v584
    %722 = vmatpush2.bf16.msra.mxu0 %v583
    %723 = vmatprep.subr.bf16.mxu0 %v582
    %724 = vmatpush2.bf16.msra.mxu0 %v581
    %725 = vmatprep.mubr.bf16.mxu0 %v682
    %726 = vmatmul.mubr.bf16.gmra.mxu0 %v669
    %v727 = vpop.f32.mrf.mxu0
    %v728 = vadd.f32 %v608, %v727
    %v729 = vpop.f32.mrf.mxu0
    %v730 = vadd.f32 %v608, %v729
    %v731 = vpop.f32.mrf.mxu0
    %v732 = vadd.f32 %v613, %v731
    %v733 = vpop.f32.mrf.mxu0
    %v734 = vadd.f32 %v613, %v733
    %735 = vmatprep.mubr.bf16.mxu0 %v685
    %736 = vmatmul.mubr.bf16.gmra.mxu0 %v671
    %v737 = vpop.f32.mrf.mxu0
    %v738 = vadd.f32 %v618, %v737
    %v739 = vpop.f32.mrf.mxu0
    %v740 = vadd.f32 %v618, %v739
    %v741 = vpop.f32.mrf.mxu0
    %v742 = vadd.f32 %v623, %v741
    %v743 = vpop.f32.mrf.mxu0
    %v744 = vadd.f32 %v623, %v743
    %745 = vmatprep.mubr.bf16.mxu0 %v688
    %746 = vmatmul.mubr.bf16.gmra.mxu0 %v673
    %v747 = vpop.f32.mrf.mxu0
    %v748 = vadd.f32 %v628, %v747
    %v749 = vpop.f32.mrf.mxu0
    %v750 = vadd.f32 %v628, %v749
    %v751 = vpop.f32.mrf.mxu0
    %v752 = vadd.f32 %v633, %v751
    %v753 = vpop.f32.mrf.mxu0
    %v754 = vadd.f32 %v633, %v753
    %755 = vmatprep.mubr.bf16.mxu0 %v691
    %756 = vmatmul.mubr.bf16.gmra.mxu0 %v675
    %v757 = vpop.f32.mrf.mxu0
    %v758 = vadd.f32 %v638, %v757
    %v759 = vpop.f32.mrf.mxu0
    %v760 = vadd.f32 %v638, %v759
    %v761 = vpop.f32.mrf.mxu0
    %v762 = vadd.f32 %v643, %v761
    %v763 = vpop.f32.mrf.mxu0
    %v764 = vadd.f32 %v643, %v763
    %765 = vdwg.mxu0
    %vm766 = vcmp.ge.f32.partialorder %v728, 0.0
    %vm767 = vcmp.ge.f32.partialorder %v730, 0.0
    %vm768 = vcmp.ge.f32.partialorder %v732, 0.0
    %vm769 = vcmp.ge.f32.partialorder %v734, 0.0
    %vm770 = vcmp.ge.f32.partialorder %v738, 0.0
    %vm771 = vcmp.ge.f32.partialorder %v740, 0.0
    %vm772 = vcmp.ge.f32.partialorder %v742, 0.0
    %vm773 = vcmp.ge.f32.partialorder %v744, 0.0
    %vm774 = vcmp.ge.f32.partialorder %v748, 0.0
    %vm775 = vcmp.ge.f32.partialorder %v750, 0.0
    %vm776 = vcmp.ge.f32.partialorder %v752, 0.0
    %vm777 = vcmp.ge.f32.partialorder %v754, 0.0
    %vm778 = vcmp.ge.f32.partialorder %v758, 0.0
    %vm779 = vcmp.ge.f32.partialorder %v760, 0.0
    %vm780 = vcmp.ge.f32.partialorder %v762, 0.0
    %vm781 = vcmp.ge.f32.partialorder %v764, 0.0
    %v782 = vmul.f32 %v728, 0.2
    %v783 = vmul.f32 %v730, 0.2
    %v784 = vmul.f32 %v732, 0.2
    %v785 = vmul.f32 %v734, 0.2
    %v786 = vmul.f32 %v738, 0.2
    %v787 = vmul.f32 %v740, 0.2
    %v788 = vmul.f32 %v742, 0.2
    %v789 = vmul.f32 %v744, 0.2
    %v790 = vmul.f32 %v748, 0.2
    %v791 = vmul.f32 %v750, 0.2
    %v792 = vmul.f32 %v752, 0.2
    %v793 = vmul.f32 %v754, 0.2
    %v794 = vmul.f32 %v758, 0.2
    %v795 = vmul.f32 %v760, 0.2
    %v796 = vmul.f32 %v762, 0.2
    %v797 = vmul.f32 %v764, 0.2
    %v798 = vsel %vm766, %v728, %v782
    %v799 = vsel %vm767, %v730, %v783
    %v800 = vsel %vm768, %v732, %v784
    %v801 = vsel %vm769, %v734, %v785
    %v802 = vsel %vm770, %v738, %v786
    %v803 = vsel %vm771, %v740, %v787
    %v804 = vsel %vm772, %v742, %v788
    %v805 = vsel %vm773, %v744, %v789
    %v806 = vsel %vm774, %v748, %v790
    %v807 = vsel %vm775, %v750, %v791
    %v808 = vsel %vm776, %v752, %v792
    %v809 = vsel %vm777, %v754, %v793
    %v810 = vsel %vm778, %v758, %v794
    %v811 = vsel %vm779, %v760, %v795
    %v812 = vsel %vm780, %v762, %v796
    %v813 = vsel %vm781, %v764, %v797
    %v814 = vadd.f32 %v50, %v798
    %v815 = vadd.f32 %v51, %v799
    %v816 = vadd.f32 %v52, %v800
    %v817 = vadd.f32 %v53, %v801
    %v818 = vadd.f32 %v54, %v802
    %v819 = vadd.f32 %v55, %v803
    %v820 = vadd.f32 %v56, %v804
    %v821 = vadd.f32 %v57, %v805
    %v822 = vadd.f32 %v58, %v806
    %v823 = vadd.f32 %v59, %v807
    %v824 = vadd.f32 %v60, %v808
    %v825 = vadd.f32 %v61, %v809
    %v826 = vadd.f32 %v62, %v810
    %v827 = vadd.f32 %v63, %v811
    %v828 = vadd.f32 %v64, %v812
    %v829 = vadd.f32 %v65, %v813
    %830 = vst [vmem:[#allocation7] sm:$0xff] %v814
    %831 = vst [vmem:[#allocation7 + $0x8] sm:$0xff] %v815
    %832 = vst [vmem:[#allocation7 + $0x10] sm:$0xff] %v816
    %833 = vst [vmem:[#allocation7 + $0x18] sm:$0xff] %v817
    %834 = vst [vmem:[#allocation7 + $0x20] sm:$0xff] %v818
    %835 = vst [vmem:[#allocation7 + $0x28] sm:$0xff] %v819
    %836 = vst [vmem:[#allocation7 + $0x30] sm:$0xff] %v820
    %837 = vst [vmem:[#allocation7 + $0x38] sm:$0xff] %v821
    %838 = vst [vmem:[#allocation7 + $0x40] sm:$0xff] %v822
    %839 = vst [vmem:[#allocation7 + $0x48] sm:$0xff] %v823
    %840 = vst [vmem:[#allocation7 + $0x50] sm:$0xff] %v824
    %841 = vst [vmem:[#allocation7 + $0x58] sm:$0xff] %v825
    %842 = vst [vmem:[#allocation7 + $0x60] sm:$0xff] %v826
    %843 = vst [vmem:[#allocation7 + $0x68] sm:$0xff] %v827
    %844 = vst [vmem:[#allocation7 + $0x70] sm:$0xff] %v828
    %845 = vst [vmem:[#allocation7 + $0x78] sm:$0xff] %v829
    // Predicated region
    $region30: #{tpu_custom_call.1} parent=1 // pred_check
      _
    $region31: #{tpu_custom_call.1} parent=1 // pred_check_branch
      %847 = sbr.rel (0) target = $region33
    $region32: #{tpu_custom_call.1} parent=1 // pred_region
      %s849 = ssub.s32 2048, 2048
      %850 = vsyncadd [#allocation4], %s849
      %s851 = sshll.u32 [#allocation7], 4
      %s852 = int_to_ptr.vmem [resolvable:$true] %s851
      %857 = dma.vmem_to_hbm [thread:$0]  %s852, 2048, %s5, [#allocation4], 256, 256, 16
    $region33: #{tpu_custom_call.1} parent=1 // pred_fallthru
      _
    // Predicated region
    $region34: #{tpu_custom_call.1} parent=1 // pred_check
      _
    $region35: #{tpu_custom_call.1} parent=1 // pred_check_branch
      %859 = sbr.rel (0) target = $region37
    $region36: #{tpu_custom_call.1} parent=1 // pred_region
      %860 = dma.done [#allocation4], 2048
    $region37: #{tpu_custom_call.1} parent=1 // pred_fallthru
      _
    %861 = vsyncpa [#allocation3], 1
    %862 = vsyncpa [#allocation6], 1
    %863 = vsyncpa [#allocation4], 1

</llo_original>
